<compile_context>
chip_gen: v6e
topology: v6e:2x2x1
jax: 0.10.0
libtpu: 0.0.40
codegen_flags: <defaults>
</compile_context>

<pallas_src>
import jax
import jax.numpy as jnp
from jax.experimental import pallas as pl
from jax.experimental.pallas import tpu as pltpu

EPS = 1e-6


def _round_up(x, m):
    return (x + m - 1) // m * m


def _sublane_multiple(dtype):
    # bf16/fp16 pack 16 sublanes per vreg; f32 packs 8.
    return 16 if jnp.dtype(dtype).itemsize == 2 else 8


def _vmem_limit_bytes():
    """~85% of per-core VMEM, capped at 112 MiB (v7x: 64 MiB/TC, v5e/v6e: 128 MiB)."""
    cap = 64 * 1024 * 1024
    try:
        cap = int(pltpu.get_tpu_info().vmem_capacity_bytes)
    except Exception:
        pass
    return min(int(cap * 0.85), 112 * 1024 * 1024)


def _pick_row_block(n, dtype, row_block):
    """Sublane-aligned token tile; clamp to data and keep >=2 grid steps if possible."""
    mult = _sublane_multiple(dtype)
    rb = _round_up(max(row_block, mult), mult)
    rb = min(rb, _round_up(n, mult))              # don't tile far past the data
    if n > mult:                                  # >=2 grid steps -> both v7x TCs busy
        rb = min(rb, _round_up(pl.cdiv(n, 2), mult))
    return max(rb, mult)


def _layernorm_f32(xf, a, b):
    """Annotated-Transformer LayerNorm in f32 (unbiased std, eps added to std)."""
    d = xf.shape[-1]
    mean = jnp.mean(xf, axis=-1, keepdims=True)
    c = xf - mean
    var = jnp.sum(c * c, axis=-1, keepdims=True) * (1.0 / (d - 1))
    std = jnp.sqrt(var)
    t = std + EPS
    inv = pl.reciprocal(t, approx=True)   # EUP slot (otherwise idle here)
    inv = inv * (2.0 - t * inv)           # one Newton step -> ~f32-exact 1/t
    return a * (c * inv) + b


def _fused_ln_linear_residual_kernel(x_ref, w_ref, c_ref, o_ref):
    """out = x + (LayerNorm(x) @ W + bias); c_ref rows = [a_2, b_2, bias]."""
    xf = x_ref[...].astype(jnp.float32)
    c = c_ref[...]
    xn = _layernorm_f32(xf, c[0:1, :], c[1:2, :])
    # bf16 operands on the MXU, f32 accumulation.
    sub = jnp.dot(xn.astype(w_ref.dtype), w_ref[...],
                  preferred_element_type=jnp.float32)
    o_ref[...] = (xf + sub + c[2:3, :]).astype(o_ref.dtype)


def _layernorm_kernel(x_ref, c_ref, o_ref):
    """c_ref rows = [a_2, b_2]."""
    xf = x_ref[...].astype(jnp.float32)
    c = c_ref[...]
    o_ref[...] = _layernorm_f32(xf, c[0:1, :], c[1:2, :]).astype(o_ref.dtype)


def sublayer_connection_linear(x, w, bias, a_2, b_2, *, row_block=512,
                               matmul_dtype=jnp.bfloat16):
    """Fully fused x + Linear(LayerNorm(x)) for x of shape (B, S, D).

    Eval-mode dropout (identity).  The whole (D, D) weight stays resident in
    VMEM as `matmul_dtype` (constant index_map).
    """
    # TODO(synk): training-mode dropout omitted; nn.Dropout in eval() is identity.
    # TODO(synk): for D >= ~4K on v7x (64 MiB/TC) add a K/N grid axis ("arbitrary")
    #             with a VMEM f32 accumulator instead of keeping W fully resident.
    b, s, d = x.shape
    n = b * s
    x2 = x.reshape(n, d)
    rb = _pick_row_block(n, x.dtype, row_block)

    # Hoisted, packed f32 constants: rows = [a_2, b_2, bias] (one constant block).
    consts = jnp.stack([a_2.astype(jnp.float32),
                        b_2.astype(jnp.float32),
                        bias.astype(jnp.float32)], axis=0)
    wv = w.astype(matmul_dtype)

    out = pl.pallas_call(
        _fused_ln_linear_residual_kernel,
        out_shape=jax.ShapeDtypeStruct((n, d), x.dtype),
        grid=(pl.cdiv(n, rb),),                     # no pad / slice: ragged tail handled
        in_specs=[
            pl.BlockSpec((rb, d), lambda i: (i, 0)),   # x token tile
            pl.BlockSpec((d, d), lambda i: (0, 0)),    # weight (resident, bf16)
            pl.BlockSpec((3, d), lambda i: (0, 0)),    # [a_2; b_2; bias]
        ],
        out_specs=pl.BlockSpec((rb, d), lambda i: (i, 0)),
        compiler_params=pltpu.CompilerParams(
            dimension_semantics=("parallel",),         # megacore-shard token axis
            vmem_limit_bytes=_vmem_limit_bytes()),
    )(x2, wv, consts)
    return out.reshape(b, s, d)


def layernorm_pallas(x2d, a_2, b_2, *, row_block=512):
    """Standalone Pallas LayerNorm over (tokens, D) with large token tiles."""
    n, d = x2d.shape
    rb = _pick_row_block(n, x2d.dtype, row_block)
    consts = jnp.stack([a_2.astype(jnp.float32),
                        b_2.astype(jnp.float32)], axis=0)
    return pl.pallas_call(
        _layernorm_kernel,
        out_shape=jax.ShapeDtypeStruct((n, d), x2d.dtype),
        grid=(pl.cdiv(n, rb),),
        in_specs=[
            pl.BlockSpec((rb, d), lambda i: (i, 0)),
            pl.BlockSpec((2, d), lambda i: (0, 0)),
        ],
        out_specs=pl.BlockSpec((rb, d), lambda i: (i, 0)),
        compiler_params=pltpu.CompilerParams(
            dimension_semantics=("parallel",),
            vmem_limit_bytes=_vmem_limit_bytes()),
    )(x2d, consts)


def sublayer_connection(x, sublayer_fn, a_2, b_2, *, row_block=512):
    """Generic path for an arbitrary `sublayer_fn`: Pallas LayerNorm (big token
    tiles) -> sublayer in plain JAX -> residual add left to XLA so it fuses into
    the sublayer's epilogue (no dedicated residual-add pallas_call)."""
    # TODO(synk): training-mode dropout omitted; nn.Dropout in eval() is identity.
    b, s, d = x.shape
    xn = layernorm_pallas(x.reshape(b * s, d), a_2, b_2,
                          row_block=row_block).reshape(b, s, d)
    return x + sublayer_fn(xn).astype(x.dtype)


def _reference(x, sublayer_fn, a_2, b_2):
    xf = x.astype(jnp.float32)
    mean = jnp.mean(xf, axis=-1, keepdims=True)
    c = xf - mean
    var = jnp.sum(c * c, axis=-1, keepdims=True) / (x.shape[-1] - 1)
    xn = a_2 * c / (jnp.sqrt(var) + EPS) + b_2
    return (xf + sublayer_fn(xn.astype(x.dtype)).astype(jnp.float32)).astype(x.dtype)


if __name__ == "__main__":
    key = jax.random.PRNGKey(0)
    B, S, D = 2, 8, 128   # lane-dense feature dim (multiple of 128)

    kx, kw, kb = jax.random.split(key, 3)
    x = jax.random.normal(kx, (B, S, D), dtype=jnp.float32)

    # LayerNorm parameters (module init: ones / zeros)
    a_2 = jnp.ones((D,), dtype=jnp.float32)
    b_2 = jnp.zeros((D,), dtype=jnp.float32)

    # Deterministic example sublayer: Linear(D, D)
    w = jax.random.normal(kw, (D, D), dtype=jnp.float32) * 0.02
    bias = jax.random.normal(kb, (D,), dtype=jnp.float32) * 0.01
    sublayer_fn = lambda t: jnp.dot(t, w, precision=jax.lax.Precision.HIGHEST) + bias

    out_fused = jax.block_until_ready(
        sublayer_connection_linear(x, w, bias, a_2, b_2))
    out_generic = jax.block_until_ready(
        sublayer_connection(x, sublayer_fn, a_2, b_2))

    ref = _reference(x, sublayer_fn, a_2, b_2)
    assert out_fused.shape == (B, S, D)
    # Fused path uses bf16 matmul operands (f32 accumulation) -> looser tolerance.
    assert jnp.allclose(out_fused, ref, atol=1e-2, rtol=1e-2), "fused kernel mismatch"
    assert jnp.allclose(out_generic, ref, atol=2e-3, rtol=2e-3), "generic path mismatch"

    print("KERNEL_OK")
</pallas_src>

<mosaic_0001>
module attributes {stable_mosaic.version = 11 : i64} {
  func.func @_fused_ln_linear_residual_kernel(%arg0: i32, %arg1: memref<8x128xf32, #tpu.memory_space<vmem>>, %arg2: memref<128x128xbf16, #tpu.memory_space<vmem>>, %arg3: memref<3x128xf32, #tpu.memory_space<vmem>>, %arg4: memref<8x128xf32, #tpu.memory_space<vmem>>) attributes {dimension_semantics = [#tpu.dimension_semantics<parallel>], iteration_bounds = array<i64: 2>, scalar_prefetch = 0 : i64, scratch_operands = 0 : i64, tpu.core_type = #tpu.core_type<tc>, window_params = [{transform_indices = @transform_0, window_bounds = array<i64: 8, 128>}, {pipeline_mode = #tpu.pipeline_mode<synchronous>, transform_indices = @transform_1, window_bounds = array<i64: 128, 128>}, {pipeline_mode = #tpu.pipeline_mode<synchronous>, transform_indices = @transform_2, window_bounds = array<i64: 3, 128>}, {transform_indices = @transform_3, window_bounds = array<i64: 8, 128>}]} {
    %c0 = arith.constant 0 : index
    %c0_0 = arith.constant 0 : index
    %0 = vector.load %arg1[%c0, %c0_0] : memref<8x128xf32, #tpu.memory_space<vmem>>, vector<8x128xf32>
    %c0_1 = arith.constant 0 : index
    %c0_2 = arith.constant 0 : index
    %1 = vector.load %arg3[%c0_1, %c0_2] : memref<3x128xf32, #tpu.memory_space<vmem>>, vector<3x128xf32>
    %2 = vector.extract_strided_slice %1 {offsets = [0, 0], sizes = [1, 128], strides = [1, 1]} : vector<3x128xf32> to vector<1x128xf32>
    %3 = vector.extract_strided_slice %1 {offsets = [1, 0], sizes = [1, 128], strides = [1, 1]} : vector<3x128xf32> to vector<1x128xf32>
    %cst = arith.constant dense<0.000000e+00> : vector<8xf32>
    %4 = vector.multi_reduction <add>, %0, %cst [1] : vector<8x128xf32> to vector<8xf32>
    %5 = vector.shape_cast %4 : vector<8xf32> to vector<8x1xf32>
    %cst_3 = arith.constant 1.280000e+02 : f32
    %6 = vector.broadcast %cst_3 : f32 to vector<8x1xf32>
    %7 = arith.divf %5, %6 : vector<8x1xf32>
    %8 = vector.broadcast %7 : vector<8x1xf32> to vector<8x128xf32>
    %9 = arith.subf %0, %8 : vector<8x128xf32>
    %10 = arith.mulf %9, %9 : vector<8x128xf32>
    %cst_4 = arith.constant dense<0.000000e+00> : vector<8xf32>
    %11 = vector.multi_reduction <add>, %10, %cst_4 [1] : vector<8x128xf32> to vector<8xf32>
    %12 = vector.shape_cast %11 : vector<8xf32> to vector<8x1xf32>
    %cst_5 = arith.constant 0.00787401571 : f32
    %13 = vector.broadcast %cst_5 : f32 to vector<8x1xf32>
    %14 = arith.mulf %12, %13 : vector<8x1xf32>
    %15 = math.sqrt %14 : vector<8x1xf32>
    %cst_6 = arith.constant 9.99999997E-7 : f32
    %16 = vector.broadcast %cst_6 : f32 to vector<8x1xf32>
    %17 = arith.addf %15, %16 : vector<8x1xf32>
    %18 = tpu.reciprocal %17 {approx = true} : vector<8x1xf32> -> vector<8x1xf32>
    %19 = arith.mulf %17, %18 : vector<8x1xf32>
    %cst_7 = arith.constant 2.000000e+00 : f32
    %20 = vector.broadcast %cst_7 : f32 to vector<8x1xf32>
    %21 = arith.subf %20, %19 : vector<8x1xf32>
    %22 = arith.mulf %18, %21 : vector<8x1xf32>
    %23 = vector.broadcast %22 : vector<8x1xf32> to vector<8x128xf32>
    %24 = arith.mulf %9, %23 : vector<8x128xf32>
    %25 = vector.broadcast %2 : vector<1x128xf32> to vector<8x128xf32>
    %26 = arith.mulf %25, %24 : vector<8x128xf32>
    %27 = vector.broadcast %3 : vector<1x128xf32> to vector<8x128xf32>
    %28 = arith.addf %26, %27 : vector<8x128xf32>
    %29 = arith.truncf %28 : vector<8x128xf32> to vector<8x128xbf16>
    %c0_8 = arith.constant 0 : index
    %c0_9 = arith.constant 0 : index
    %30 = vector.load %arg2[%c0_8, %c0_9] : memref<128x128xbf16, #tpu.memory_space<vmem>>, vector<128x128xbf16>
    %cst_10 = arith.constant dense<0.000000e+00> : vector<8x128xf32>
    %31 = tpu.matmul %29, %30, %cst_10 {dimension_numbers = #tpu.dot_dimension_numbers<[1], [0], [0], [1], [0, 0, 1, 1], [], []>} : vector<8x128xbf16>, vector<128x128xbf16>, vector<8x128xf32> -> vector<8x128xf32>
    %32 = arith.addf %0, %31 : vector<8x128xf32>
    %33 = vector.extract_strided_slice %1 {offsets = [2, 0], sizes = [1, 128], strides = [1, 1]} : vector<3x128xf32> to vector<1x128xf32>
    %34 = vector.broadcast %33 : vector<1x128xf32> to vector<8x128xf32>
    %35 = arith.addf %32, %34 : vector<8x128xf32>
    %c0_11 = arith.constant 0 : index
    %c0_12 = arith.constant 0 : index
    %36 = vector.load %arg4[%c0_11, %c0_12] : memref<8x128xf32, #tpu.memory_space<vmem>>, vector<8x128xf32>
    tpu.vector_store %arg4[%c0_11, %c0_12], %35 {strides = array<i32>} : memref<8x128xf32, #tpu.memory_space<vmem>>, vector<8x128xf32>,
    return
  }
  func.func @transform_0(%arg0: i32) -> (i32, i32) {
    %c0_i32 = arith.constant 0 : i32
    %c0_i32_0 = arith.constant 0 : i32
    return %arg0, %c0_i32 : i32, i32
  }
  func.func @transform_1(%arg0: i32) -> (i32, i32) {
    %c0_i32 = arith.constant 0 : i32
    %c0_i32_0 = arith.constant 0 : i32
    %c0_i32_1 = arith.constant 0 : i32
    return %c0_i32, %c0_i32_0 : i32, i32
  }
  func.func @transform_2(%arg0: i32) -> (i32, i32) {
    %c0_i32 = arith.constant 0 : i32
    %c0_i32_0 = arith.constant 0 : i32
    %c0_i32_1 = arith.constant 0 : i32
    return %c0_i32, %c0_i32_0 : i32, i32
  }
  func.func @transform_3(%arg0: i32) -> (i32, i32) {
    %c0_i32 = arith.constant 0 : i32
    %c0_i32_0 = arith.constant 0 : i32
    return %arg0, %c0_i32 : i32, i32
  }
}

</mosaic_0001>

<llo_original>
// kernel: tpu_custom_call.1
$region0: #{tpu_custom_call.1}
  #allocation0 [shape = 'u32[]', space=smem, size = 0x4, offset = 0x4, fixed_abs, tag = 'smem constant byte address 0x4 - core index']
  #allocation1 [shape = 'u32[144,128]{1,0:T(1,128)}', space=vmem, size = 0x12000, scoped, tag = 'internal scratch']
  %s0 = inlined_call_operand.hbm [shape: f32[16,128], index: 0, kind: input, shape index: {}]
  %s1 = inlined_call_operand.hbm [shape: bf16[128,128], index: 1, kind: input, shape index: {}]
  %s2 = inlined_call_operand.hbm [shape: f32[3,128], index: 2, kind: input, shape index: {}]
  %s3 = inlined_call_operand.hbm [shape: f32[16,128], index: 3, kind: output, shape index: {}]
  %s4 = sld [smem:[#allocation0]]
  $region57: #{tpu_custom_call.1} parent=0
    _
  %s6 = ssub.s32 1, %s4
  %s7 = scalar_select 0, %s6, %s4
  $region1: #{tpu_custom_call.1} parent=0
    #allocation2 [shape = 'u8[8192]{0}', space=vmem, size = 0x2000, scoped, tag = 'input window, operand 0']
    #allocation3 [shape = 's32[2]{0}', space=sflag, size = 0x8, scoped, tag = 'scoped memory for tpu_custom_call.1']
    #allocation4 [shape = 's32[2]{0}', space=sflag, size = 0x8, scoped, tag = 'scoped memory for tpu_custom_call.1']
    #allocation5 [shape = 'u8[32768]{0}', space=vmem, size = 0x8000, scoped, tag = 'input window, operand 1, single buffered']
    #allocation6 [shape = 's32[1]{0}', space=sflag, size = 0x4, scoped, tag = 'scoped memory for tpu_custom_call.1']
    #allocation7 [shape = 'u8[2048]{0}', space=vmem, size = 0x800, scoped, tag = 'input window, operand 2, single buffered']
    #allocation8 [shape = 'u8[8192]{0}', space=vmem, size = 0x2000, scoped, tag = 'output window, operand 0']
    %8 = vsyncpa [#allocation3], 0
    %s9 = scalar_lea.sflag [#allocation3], 1
    %10 = vsyncpa %s9, 0
    %11 = vsyncpa [#allocation6], 0
    %12 = vsyncpa [#allocation4], 0
    %s13 = scalar_lea.sflag [#allocation4], 1
    %14 = vsyncpa %s13, 0
    loop: start=0, step=1, limit=4
    $region2: #{tpu_custom_call.1} parent=1 // loop_pre_header
      _
    $region3: #{tpu_custom_call.1} parent=1 // loop_header
      %s16 = sphi 0, %s20
      %p17 = scmp.ge.s32.totalorder %s16, 4
      %s26 = sphi 0, %s28
      %s29 = sphi 0, %s26
      %s30 = sphi 0, %s29
      %s46 = sphi 0, %s30
      %s50 = sphi 0, %s50
      %s52 = sphi 0, %s50
      %s53 = sphi 0, %s52
      %s67 = sphi 0, %s53
      %s71 = sphi 0, %s71
      %s73 = sphi 0, %s71
      %s74 = sphi 0, %s73
      %s88 = sphi 0, %s74
      %s94 = sphi 0, %s96
      %s97 = sphi 0, %s94
      %s98 = sphi 0, %s97
      %s114 = sphi 0, %s98
    $region4: #{tpu_custom_call.1} parent=1 // loop_header_branch
      %19 = sbr.rel (%p17) target = $region8
    $region5: #{tpu_custom_call.1} parent=1 // loop_body
      %s21 = ssub.s32 %s16, 1
      %s22 = ssub.s32 %s16, 2
      %s23 = sadd.s32 %s16, 1
      %s24 = ssub.s32 %s16, %s23
      %p25 = scmp.eq.s32.totalorder %s24, 0
      %s27 = sadd.s32 %s26, 1
      %s28 = scalar_select %p25, %s26, %s27
      %p31 = pneg %p25
      %p32 = scmp.eq.s32.totalorder %s16, 1
      %p33 = por %p31, %p32
      %p34 = scmp.ne.s32.totalorder %s26, %s29
      %p35 = scmp.eq.s32.totalorder %s16, 0
      %p36 = por %p34, %p35
      %p37 = scmp.ne.s32.totalorder %s26, %s29
      %p38 = scmp.eq.s32.totalorder %s21, 1
      %p39 = por %p37, %p38
      %p40 = scmp.ne.s32.totalorder %s29, %s30
      %p41 = scmp.eq.s32.totalorder %s21, 0
      %p42 = por %p40, %p41
      %p43 = scmp.ne.s32.totalorder %s29, %s30
      %p44 = scmp.eq.s32.totalorder %s22, 1
      %p45 = por %p43, %p44
      %p47 = scmp.ne.s32.totalorder %s30, %s46
      %p48 = scmp.eq.s32.totalorder %s22, 0
      %p49 = por %p47, %p48
      %s51 = sadd.s32 %s50, 1
      %p54 = scmp.eq.s32.totalorder %s16, 1
      %p55 = scmp.ne.s32.totalorder %s50, %s52
      %p56 = scmp.eq.s32.totalorder %s16, 0
      %p57 = por %p55, %p56
      %p58 = scmp.ne.s32.totalorder %s50, %s52
      %p59 = scmp.eq.s32.totalorder %s21, 1
      %p60 = por %p58, %p59
      %p61 = scmp.ne.s32.totalorder %s52, %s53
      %p62 = scmp.eq.s32.totalorder %s21, 0
      %p63 = por %p61, %p62
      %p64 = scmp.ne.s32.totalorder %s52, %s53
      %p65 = scmp.eq.s32.totalorder %s22, 1
      %p66 = por %p64, %p65
      %p68 = scmp.ne.s32.totalorder %s53, %s67
      %p69 = scmp.eq.s32.totalorder %s22, 0
      %p70 = por %p68, %p69
      %s72 = sadd.s32 %s71, 1
      %p75 = scmp.eq.s32.totalorder %s16, 1
      %p76 = scmp.ne.s32.totalorder %s71, %s73
      %p77 = scmp.eq.s32.totalorder %s16, 0
      %p78 = por %p76, %p77
      %p79 = scmp.ne.s32.totalorder %s71, %s73
      %p80 = scmp.eq.s32.totalorder %s21, 1
      %p81 = por %p79, %p80
      %p82 = scmp.ne.s32.totalorder %s73, %s74
      %p83 = scmp.eq.s32.totalorder %s21, 0
      %p84 = por %p82, %p83
      %p85 = scmp.ne.s32.totalorder %s73, %s74
      %p86 = scmp.eq.s32.totalorder %s22, 1
      %p87 = por %p85, %p86
      %p89 = scmp.ne.s32.totalorder %s74, %s88
      %p90 = scmp.eq.s32.totalorder %s22, 0
      %p91 = por %p89, %p90
      %s92 = ssub.s32 %s16, %s23
      %p93 = scmp.eq.s32.totalorder %s92, 0
      %s95 = sadd.s32 %s94, 1
      %s96 = scalar_select %p93, %s94, %s95
      %p99 = pneg %p93
      %p100 = scmp.eq.s32.totalorder %s16, 1
      %p101 = por %p99, %p100
      %p102 = scmp.ne.s32.totalorder %s94, %s97
      %p103 = scmp.eq.s32.totalorder %s16, 0
      %p104 = por %p102, %p103
      %p105 = scmp.ne.s32.totalorder %s94, %s97
      %p106 = scmp.eq.s32.totalorder %s21, 1
      %p107 = por %p105, %p106
      %p108 = scmp.ne.s32.totalorder %s97, %s98
      %p109 = scmp.eq.s32.totalorder %s21, 0
      %p110 = por %p108, %p109
      %p111 = scmp.ne.s32.totalorder %s97, %s98
      %p112 = scmp.eq.s32.totalorder %s22, 1
      %p113 = por %p111, %p112
      %p115 = scmp.ne.s32.totalorder %s98, %s114
      %p116 = scmp.eq.s32.totalorder %s22, 0
      %p117 = por %p115, %p116
      %p118 = scmp.le.s32.totalorder 1, %s16
      %p119 = scmp.lt.s32.totalorder %s16, 3
      %p120 = pnand %p118, %p119
      %p121 = pneg %p120
      // Predicated region
      $region9: #{tpu_custom_call.1} parent=5 // pred_check
        _
      $region10: #{tpu_custom_call.1} parent=5 // pred_check_branch
        %123 = sbr.rel (%p120) target = $region12
      $region11: #{tpu_custom_call.1} parent=5 // pred_region
        %s124 = ssub.s32 %s16, 1
        // Predicated region
        $region13: #{tpu_custom_call.1} parent=11 // pred_check
          %p125 = pneg %p63
        $region14: #{tpu_custom_call.1} parent=11 // pred_check_branch
          %127 = sbr.rel (%p125) target = $region16
        $region15: #{tpu_custom_call.1} parent=11 // pred_region
          %s129 = ssub.s32 1024, 1024
          %130 = vsyncadd [#allocation6], %s129
          %s131 = sshll.u32 [#allocation5], 4
          %s132 = int_to_ptr.vmem [resolvable:$true] %s131
          %137 = dma.hbm_to_vmem [thread:$0]  %s1, 1024, %s132, [#allocation6], 64, 64, 4
        $region16: #{tpu_custom_call.1} parent=11 // pred_fallthru
          _
        // Predicated region
        $region17: #{tpu_custom_call.1} parent=11 // pred_check
          %p138 = pneg %p84
        $region18: #{tpu_custom_call.1} parent=11 // pred_check_branch
          %140 = sbr.rel (%p138) target = $region20
        $region19: #{tpu_custom_call.1} parent=11 // pred_region
          %s142 = ssub.s32 64, 64
          %143 = vsyncadd [#allocation6], %s142
          %s145 = sshll.u32 [#allocation7], 4
          %s146 = int_to_ptr.vmem [resolvable:$true] %s145
          %148 = dma.hbm_to_vmem [thread:$0]  %s2, 64, %s146, [#allocation6]
        $region20: #{tpu_custom_call.1} parent=11 // pred_fallthru
          _
      $region12: #{tpu_custom_call.1} parent=5 // pred_fallthru
        _
      %p149 = scmp.lt.s32.totalorder %s16, 2
      // Predicated region
      $region21: #{tpu_custom_call.1} parent=5 // pred_check
        %p150 = pneg %p149
      $region22: #{tpu_custom_call.1} parent=5 // pred_check_branch
        %152 = sbr.rel (%p150) target = $region24
      $region23: #{tpu_custom_call.1} parent=5 // pred_region
        // Predicated region
        $region25: #{tpu_custom_call.1} parent=23 // pred_check
          %p153 = pneg %p36
        $region26: #{tpu_custom_call.1} parent=23 // pred_check_branch
          %155 = sbr.rel (%p153) target = $region28
        $region27: #{tpu_custom_call.1} parent=23 // pred_region
          %s156 = sand.u32 %s26, 1
          %s157 = scalar_lea.sflag [#allocation3], %s156
          %s158 = sand.u32 %s26, 1
          %s159 = smul.addr %s158, 8
          %s160 = scalar_lea.vmem [#allocation2], %s159
          %s162 = ssub.s32 128, 128
          %163 = vsyncadd %s157, %s162
          %s164 = smul.addr %s16, 128
          %s165 = scalar_lea.hbm %s0, %s164
          %s167 = sshll.u32 %s160, 4
          %s168 = int_to_ptr.vmem [resolvable:$true] %s167
          %170 = dma.hbm_to_vmem [thread:$0]  %s165, 128, %s168, %s157
        $region28: #{tpu_custom_call.1} parent=23 // pred_fallthru
          _
      $region24: #{tpu_custom_call.1} parent=5 // pred_fallthru
        _
      %p171 = scmp.le.s32.totalorder 1, %s16
      %p172 = scmp.lt.s32.totalorder %s16, 3
      %p173 = pnand %p171, %p172
      %p174 = pneg %p173
      // Predicated region
      $region29: #{tpu_custom_call.1} parent=5 // pred_check
        _
      $region30: #{tpu_custom_call.1} parent=5 // pred_check_branch
        %176 = sbr.rel (%p173) target = $region32
      $region31: #{tpu_custom_call.1} parent=5 // pred_region
        %s177 = ssub.s32 %s16, 1
        %s178 = sand.u32 %s29, 1
        %s179 = scalar_lea.sflag [#allocation3], %s178
        %s180 = sand.u32 %s29, 1
        %s181 = smul.addr %s180, 8
        %s182 = scalar_lea.vmem [#allocation2], %s181
        // Predicated region
        $region33: #{tpu_custom_call.1} parent=31 // pred_check
          %p183 = pneg %p42
        $region34: #{tpu_custom_call.1} parent=31 // pred_check_branch
          %185 = sbr.rel (%p183) target = $region36
        $region35: #{tpu_custom_call.1} parent=31 // pred_region
          %186 = dma.done %s179, 128
        $region36: #{tpu_custom_call.1} parent=31 // pred_fallthru
          _
        // Predicated region
        $region37: #{tpu_custom_call.1} parent=31 // pred_check
          %p187 = pneg %p63
        $region38: #{tpu_custom_call.1} parent=31 // pred_check_branch
          %189 = sbr.rel (%p187) target = $region40
        $region39: #{tpu_custom_call.1} parent=31 // pred_region
          %190 = dma.done [#allocation6], 1024
        $region40: #{tpu_custom_call.1} parent=31 // pred_fallthru
          _
        // Predicated region
        $region41: #{tpu_custom_call.1} parent=31 // pred_check
          %p191 = pneg %p84
        $region42: #{tpu_custom_call.1} parent=31 // pred_check_branch
          %193 = sbr.rel (%p191) target = $region44
        $region43: #{tpu_custom_call.1} parent=31 // pred_region
          %194 = dma.done [#allocation6], 64
        $region44: #{tpu_custom_call.1} parent=31 // pred_fallthru
          _
        %s195 = sand.u32 %s29, 1
        %s196 = scalar_lea.sflag [#allocation3], %s195
        %s197 = sand.u32 %s29, 1
        %s198 = smul.addr %s197, 8
        %s199 = scalar_lea.vmem [#allocation2], %s198
        %p200 = pneg %p42
        %p201 = pneg %p39
        %p202 = pneg %p63
        %p203 = pneg %p60
        %p204 = pneg %p84
        %p205 = pneg %p81
        %p206 = pneg %p110
        %p207 = pneg %p107
        %s208 = sand.u32 %s97, 1
        %s209 = scalar_lea.sflag [#allocation4], %s208
        %s210 = sand.u32 %s97, 1
        %s211 = smul.addr %s210, 8
        %s212 = scalar_lea.vmem [#allocation8], %s211
        %v214 = vld [vmem:[%s182] sm:$0xff]
        %v215 = vld [vmem:[#allocation7] sm:$0x7]
        %216 = vadd.xlane.f32.xlu0 %v214
        %v217 = vpop.xlane.xlu0 %216
        %v218 = vrcp.pop 128.0
        %v219 = vmul.f32 %v217, %v218
        %v220 = vsub.f32 %v214, %v219
        %v221 = vmul.f32 %v220, %v220
        %222 = vadd.xlane.f32.xlu0 %v221
        %v223 = vpop.xlane.xlu0 %222
        %v224 = vmul.f32 %v223, 0.007874016
        %v225 = vrsqrt.pop %v224
        %v226 = vmul.f32 %v224, %v225
        %vm227 = vcmp.eq.f32.partialorder %v224, inf
        %v228 = vsel %vm227, %v224, %v226
        %vm229 = vcmp.eq.f32.partialorder %v224, 0.0
        %v230 = vand.u32 %v224, 2147483648
        %v231 = vsel %vm229, %v230, %v228
        %v232 = vadd.f32 %v231, 1e-06
        %v233 = vrcp.pop %v232
        %v234 = vmul.f32 %v232, %v233
        %v235 = vsub.f32 2.0, %v234
        %v236 = vmul.f32 %v233, %v235
        %v237 = vmul.f32 %v220, %v236
        %v238 = vlaneseq
        %v239 = vshrl.u32 %v238, 7
        %v240 = vsub.s32 0, %v239
        %v241 = vrot.slane %v215, %v240
        %v242 = vmul.f32 %v241, %v237
        %v243 = vlaneseq
        %v244 = vshrl.u32 %v243, 7
        %v245 = vsub.s32 1, %v244
        %v246 = vrot.slane %v215, %v245
        %v247 = vadd.f32 %v242, %v246
        %v248 = vpack.c.bf16 %v247, %v247
        %v249 = vld [vmem:[#allocation5] sm:$0xf]
        %v250 = vld [vmem:[#allocation5 + $0x4] sm:$0xf]
        %v251 = vld [vmem:[#allocation5 + $0x8] sm:$0xf]
        %v252 = vld [vmem:[#allocation5 + $0xc] sm:$0xf]
        %v253 = vld [vmem:[#allocation5 + $0x10] sm:$0xf]
        %v254 = vld [vmem:[#allocation5 + $0x14] sm:$0xf]
        %v255 = vld [vmem:[#allocation5 + $0x18] sm:$0xf]
        %v256 = vld [vmem:[#allocation5 + $0x1c] sm:$0xf]
        %v257 = vld [vmem:[#allocation5 + $0x20] sm:$0xf]
        %v258 = vld [vmem:[#allocation5 + $0x24] sm:$0xf]
        %v259 = vld [vmem:[#allocation5 + $0x28] sm:$0xf]
        %v260 = vld [vmem:[#allocation5 + $0x2c] sm:$0xf]
        %v261 = vld [vmem:[#allocation5 + $0x30] sm:$0xf]
        %v262 = vld [vmem:[#allocation5 + $0x34] sm:$0xf]
        %v263 = vld [vmem:[#allocation5 + $0x38] sm:$0xf]
        %v264 = vld [vmem:[#allocation5 + $0x3c] sm:$0xf]
        %v281 = vunpack.c.l.b16 %v249
        %v282 = vunpack.c.l.b16 %v250
        %v283 = vunpack.c.l.b16 %v251
        %v284 = vunpack.c.l.b16 %v252
        %v285 = vunpack.c.l.b16 %v253
        %v286 = vunpack.c.l.b16 %v254
        %v287 = vunpack.c.l.b16 %v255
        %v288 = vunpack.c.l.b16 %v256
        %v289 = vunpack.c.l.b16 %v257
        %v290 = vunpack.c.l.b16 %v258
        %v291 = vunpack.c.l.b16 %v259
        %v292 = vunpack.c.l.b16 %v260
        %v293 = vunpack.c.l.b16 %v261
        %v294 = vunpack.c.l.b16 %v262
        %v295 = vunpack.c.l.b16 %v263
        %v296 = vunpack.c.l.b16 %v264
        %v297 = vpack.c.b16 %v282, %v281
        %v298 = vpack.c.b16 %v284, %v283
        %v299 = vpack.c.b16 %v286, %v285
        %v300 = vpack.c.b16 %v288, %v287
        %v301 = vpack.c.b16 %v290, %v289
        %v302 = vpack.c.b16 %v292, %v291
        %v303 = vpack.c.b16 %v294, %v293
        %v304 = vpack.c.b16 %v296, %v295
        %313 = vmatprep.subr.bf16.mxu0 0
        %314 = vmatpush1.bf16.msra.mxu0 %v304
        %315 = vmatprep.subr.bf16.mxu0 0
        %316 = vmatpush1.bf16.msra.mxu0 %v303
        %317 = vmatprep.subr.bf16.mxu0 0
        %318 = vmatpush1.bf16.msra.mxu0 %v302
        %319 = vmatprep.subr.bf16.mxu0 0
        %320 = vmatpush1.bf16.msra.mxu0 %v301
        %321 = vmatprep.subr.bf16.mxu0 0
        %322 = vmatpush1.bf16.msra.mxu0 %v300
        %323 = vmatprep.subr.bf16.mxu0 0
        %324 = vmatpush1.bf16.msra.mxu0 %v299
        %325 = vmatprep.subr.bf16.mxu0 0
        %326 = vmatpush1.bf16.msra.mxu0 %v298
        %327 = vmatprep.subr.bf16.mxu0 0
        %328 = vmatpush1.bf16.msra.mxu0 %v297
        %329 = vmatprep.subr.bf16.mxu0 0
        %330 = vmatpush2.bf16.msra.mxu0 0
        %331 = vmatprep.subr.bf16.mxu0 0
        %332 = vmatpush2.bf16.msra.mxu0 0
        %333 = vmatprep.subr.bf16.mxu0 0
        %334 = vmatpush2.bf16.msra.mxu0 0
        %335 = vmatprep.subr.bf16.mxu0 0
        %336 = vmatpush2.bf16.msra.mxu0 0
        %337 = vmatprep.subr.bf16.mxu0 0
        %338 = vmatpush2.bf16.msra.mxu0 0
        %339 = vmatprep.subr.bf16.mxu0 0
        %340 = vmatpush2.bf16.msra.mxu0 0
        %341 = vmatprep.subr.bf16.mxu0 0
        %342 = vmatpush2.bf16.msra.mxu0 0
        %343 = vmatprep.subr.bf16.mxu0 0
        %344 = vmatpush2.bf16.msra.mxu0 0
        %345 = vmatprep.mubr.bf16.mxu0 0
        %346 = vmatmul.mubr.bf16.gmra.mxu0 %v248
        %v347 = vpop.f32.mrf.mxu0
        %v348 = vadd.f32 0.0, %v347
        %v349 = vpop.f32.mrf.mxu0
        %v350 = vpop.f32.mrf.mxu0
        %v351 = vpop.f32.mrf.mxu0
        %352 = vdwg.mxu0
        %v353 = vadd.f32 %v214, %v348
        %v354 = vlaneseq
        %v355 = vshrl.u32 %v354, 7
        %v356 = vsub.s32 2, %v355
        %v357 = vrot.slane %v215, %v356
        %v358 = vadd.f32 %v353, %v357
        %359 = vst [vmem:[%s212] sm:$0xff] %v358
        %s360 = sand.u32 %s97, 1
        %s361 = scalar_lea.sflag [#allocation4], %s360
        %s362 = sand.u32 %s97, 1
        %s363 = smul.addr %s362, 8
        %s364 = scalar_lea.vmem [#allocation8], %s363
        // Predicated region
        $region45: #{tpu_custom_call.1} parent=31 // pred_check
          %p365 = pneg %p107
        $region46: #{tpu_custom_call.1} parent=31 // pred_check_branch
          %367 = sbr.rel (%p365) target = $region48
        $region47: #{tpu_custom_call.1} parent=31 // pred_region
          %s369 = ssub.s32 128, 128
          %370 = vsyncadd %s361, %s369
          %s371 = smul.addr %s21, 128
          %s372 = scalar_lea.hbm %s3, %s371
          %s374 = sshll.u32 %s364, 4
          %s375 = int_to_ptr.vmem [resolvable:$true] %s374
          %377 = dma.vmem_to_hbm [thread:$0]  %s375, 128, %s372, %s361
        $region48: #{tpu_custom_call.1} parent=31 // pred_fallthru
          _
      $region32: #{tpu_custom_call.1} parent=5 // pred_fallthru
        _
      %p378 = scmp.le.s32.totalorder 2, %s16
      // Predicated region
      $region49: #{tpu_custom_call.1} parent=5 // pred_check
        %p379 = pneg %p378
      $region50: #{tpu_custom_call.1} parent=5 // pred_check_branch
        %381 = sbr.rel (%p379) target = $region52
      $region51: #{tpu_custom_call.1} parent=5 // pred_region
        %s382 = ssub.s32 %s16, 2
        // Predicated region
        $region53: #{tpu_custom_call.1} parent=51 // pred_check
          %p383 = pneg %p113
        $region54: #{tpu_custom_call.1} parent=51 // pred_check_branch
          %385 = sbr.rel (%p383) target = $region56
        $region55: #{tpu_custom_call.1} parent=51 // pred_region
          %s386 = sand.u32 %s98, 1
          %s387 = scalar_lea.sflag [#allocation4], %s386
          %s388 = sand.u32 %s98, 1
          %s389 = smul.addr %s388, 8
          %s390 = scalar_lea.vmem [#allocation8], %s389
          %391 = dma.done %s387, 128
        $region56: #{tpu_custom_call.1} parent=51 // pred_fallthru
          _
      $region52: #{tpu_custom_call.1} parent=5 // pred_fallthru
        _
    $region6: #{tpu_custom_call.1} parent=1 // loop_footer
      %s20 = sadd.s32 1, %s16
    $region7: #{tpu_custom_call.1} parent=1 // loop_footer_branch
      %15 = sbr.rel target = $region3
    $region8: #{tpu_custom_call.1} parent=1 // loop_exit
      _
    %392 = vsyncpa [#allocation3], 1
    %s393 = scalar_lea.sflag [#allocation3], 1
    %394 = vsyncpa %s393, 1
    %395 = vsyncpa [#allocation6], 1
    %396 = vsyncpa [#allocation4], 1
    %s397 = scalar_lea.sflag [#allocation4], 1
    %398 = vsyncpa %s397, 1

</llo_original>
